<compile_context>
chip_gen: v5e
topology: v5e:2x2
jax: 0.10.0
libtpu: 0.0.40
codegen_flags: <defaults>
</compile_context>

<pallas_src>
import jax
import jax.numpy as jnp
from jax.experimental import pallas as pl
from jax.experimental.pallas import tpu as pltpu

_LANES = 128


def _sublane_min(dtype) -> int:
    """Minimum second-minor tile size for a dtype (8 f32, 16 bf16, 32 int8/fp8)."""
    itemsize = jnp.dtype(dtype).itemsize
    return max(8, 32 // max(1, itemsize))


def _swrelu_kernel(x_ref, o_ref):
    # Elementwise ReLU on one (brows, 128) VMEM tile. Scalar 0 avoids
    # materializing a per-tile broadcast; VPU work is hidden under the DMA.
    o_ref[...] = jnp.maximum(x_ref[...], 0)


def swrelu(x: jax.Array, *, target_block_bytes: int = 4 << 20) -> jax.Array:
    """ReLU forward (== swextension.swrelu_forward) via a Pallas TPU kernel."""
    orig_shape = x.shape
    dtype = x.dtype
    n = x.size
    if n == 0:
        return x

    sub = _sublane_min(dtype)
    itemsize = jnp.dtype(dtype).itemsize

    flat = x.reshape(-1)

    # Fast path: no wrapper-side pad/slice (each is a full extra HBM round
    # trip) when the flat length already forms whole 128-lane rows. Typical
    # NCHW conv activation maps take this path.
    padded = (n % _LANES) != 0
    if padded:
        # Slow path: pad up to a whole (sub, 128) tile so the 2-D view is
        # layout-aligned, then slice back at the end.
        # TODO(synk): handle the ragged tail in-kernel with a scalar-prefetched
        # length + masked store to avoid the pad/slice copies entirely.
        pad_to = sub * _LANES
        flat = jnp.pad(flat, (0, (-n) % pad_to))

    rows = flat.shape[0] // _LANES
    x2d = flat.reshape(rows, _LANES)

    # Block rows: multiple of the dtype's sublane minimum, sized so one block
    # is ~target_block_bytes. 2 arrays x 2 pipeline buffers x block stays well
    # under the 32 MiB scoped-VMEM limit set below.
    bytes_per_row = _LANES * itemsize
    brows = max(sub, (target_block_bytes // bytes_per_row) // sub * sub)

    if rows <= brows:
        # Small input: a single block equal to the full array (always a legal
        # block shape) -> no grid/pipeline overhead.
        brows = rows
        grid = (1,)
    else:
        # cdiv grid: Pallas masks the partial last block, so `rows` is never
        # rounded up to a multiple of brows (no wasted reads/writes).
        grid = (pl.cdiv(rows, brows),)

    out2d = pl.pallas_call(
        _swrelu_kernel,
        out_shape=jax.ShapeDtypeStruct((rows, _LANES), dtype),
        grid_spec=pltpu.PrefetchScalarGridSpec(
            num_scalar_prefetch=0,
            grid=grid,
            in_specs=[pl.BlockSpec((brows, _LANES), lambda i: (i, 0))],
            out_specs=pl.BlockSpec((brows, _LANES), lambda i: (i, 0)),
        ),
        compiler_params=pltpu.CompilerParams(
            dimension_semantics=("parallel",),
            vmem_limit_bytes=32 << 20,
        ),
    )(x2d)

    if padded:
        return out2d.reshape(-1)[:n].reshape(orig_shape)
    return out2d.reshape(orig_shape)


if __name__ == "__main__":
    # Primary test: small NCHW activation map, consistent with module usage.
    x = jax.random.normal(jax.random.PRNGKey(0), (2, 4, 16, 16), dtype=jnp.float32)
    y = swrelu(x)
    jax.block_until_ready(y)
    assert y.shape == x.shape and y.dtype == x.dtype
    assert bool(jnp.allclose(y, jnp.maximum(x, 0.0))), "mismatch (f32, single-block path)"

    # Exercise the multi-block tiled path (small target block -> grid > 1)
    # and bf16 sublane packing.
    x2 = jax.random.normal(jax.random.PRNGKey(1), (2, 8, 32, 32), dtype=jnp.bfloat16)
    y2 = swrelu(x2, target_block_bytes=16 * 1024)
    jax.block_until_ready(y2)
    assert y2.shape == x2.shape and y2.dtype == x2.dtype
    assert bool(jnp.all(y2 == jnp.maximum(x2, 0))), "mismatch (bf16, tiled path)"

    # Exercise the ragged-tail (padded) fallback path.
    x3 = jax.random.normal(jax.random.PRNGKey(2), (3, 5, 7, 11), dtype=jnp.float32)
    y3 = swrelu(x3)
    jax.block_until_ready(y3)
    assert bool(jnp.allclose(y3, jnp.maximum(x3, 0.0))), "mismatch (ragged path)"

    print("KERNEL_OK")
</pallas_src>

<mosaic_0001>
module attributes {stable_mosaic.version = 11 : i64} {
  func.func @_swrelu_kernel(%arg0: i32, %arg1: memref<16x128xf32, #tpu.memory_space<vmem>>, %arg2: memref<16x128xf32, #tpu.memory_space<vmem>>) attributes {dimension_semantics = [#tpu.dimension_semantics<parallel>], iteration_bounds = array<i64: 1>, scalar_prefetch = 0 : i64, scratch_operands = 0 : i64, tpu.core_type = #tpu.core_type<tc>, window_params = [{transform_indices = @transform_0, window_bounds = array<i64: 16, 128>}, {transform_indices = @transform_1, window_bounds = array<i64: 16, 128>}]} {
    %c0 = arith.constant 0 : index
    %c0_0 = arith.constant 0 : index
    %0 = vector.load %arg1[%c0, %c0_0] : memref<16x128xf32, #tpu.memory_space<vmem>>, vector<16x128xf32>
    %cst = arith.constant 0.000000e+00 : f32
    %1 = vector.broadcast %cst : f32 to vector<16x128xf32>
    %2 = arith.maximumf %0, %1 : vector<16x128xf32>
    %c0_1 = arith.constant 0 : index
    %c0_2 = arith.constant 0 : index
    %3 = vector.load %arg2[%c0_1, %c0_2] : memref<16x128xf32, #tpu.memory_space<vmem>>, vector<16x128xf32>
    tpu.vector_store %arg2[%c0_1, %c0_2], %2 {strides = array<i32>} : memref<16x128xf32, #tpu.memory_space<vmem>>, vector<16x128xf32>,
    return
  }
  func.func @transform_0(%arg0: i32) -> (i32, i32) {
    %c0_i32 = arith.constant 0 : i32
    %c0_i32_0 = arith.constant 0 : i32
    return %arg0, %c0_i32 : i32, i32
  }
  func.func @transform_1(%arg0: i32) -> (i32, i32) {
    %c0_i32 = arith.constant 0 : i32
    %c0_i32_0 = arith.constant 0 : i32
    return %arg0, %c0_i32 : i32, i32
  }
}

</mosaic_0001>

<llo_original>
// kernel: tpu_custom_call.1
$region0: #{tpu_custom_call.1}
  #allocation0 [shape = 'u32[]', space=smem, size = 0x4, offset = 0x4, fixed_abs, tag = 'smem constant byte address 0x4 - core index']
  #allocation1 [shape = 'u32[72,128]{1,0:T(1,128)}', space=vmem, size = 0x9000, scoped, tag = 'internal scratch']
  %s0 = inlined_call_operand.hbm [shape: f32[16,128], index: 0, kind: input, shape index: {}]
  %s1 = inlined_call_operand.hbm [shape: f32[16,128], index: 1, kind: output, shape index: {}]
  %s2 = sld [smem:[#allocation0]]
  $region18: #{tpu_custom_call.1} parent=0
    _
  %s4 = ssub.s32 1, %s2
  %s5 = scalar_select 0, %s4, %s2
  $region1: #{tpu_custom_call.1} parent=0
    #allocation2 [shape = 'u8[8192]{0}', space=vmem, size = 0x2000, scoped, tag = 'input window, operand 0, single buffered']
    #allocation3 [shape = 's32[1]{0}', space=sflag, size = 0x4, scoped, tag = 'scoped memory for tpu_custom_call.1']
    #allocation4 [shape = 's32[1]{0}', space=sflag, size = 0x4, scoped, tag = 'scoped memory for tpu_custom_call.1']
    #allocation5 [shape = 'u8[8192]{0}', space=vmem, size = 0x2000, scoped, tag = 'output window, operand 0, single buffered']
    %6 = vsyncpa [#allocation3], 0
    %7 = vsyncpa [#allocation4], 0
    // Predicated region
    $region2: #{tpu_custom_call.1} parent=1 // pred_check
      _
    $region3: #{tpu_custom_call.1} parent=1 // pred_check_branch
      %9 = sbr.rel (0) target = $region5
    $region4: #{tpu_custom_call.1} parent=1 // pred_region
      %11 = vsyncadd [#allocation3], 0
      %s12 = sshll.u32 %s0, 4
      %s13 = int_to_ptr.hbm [resolvable:$true] %s12
      %s14 = sshll.u32 [#allocation2], 4
      %s15 = int_to_ptr.vmem [resolvable:$true] %s14
      %20 = dma.hbm_to_vmem [thread:$0]  %s13, 256, %s15, [#allocation3], 128, 128, 8
    $region5: #{tpu_custom_call.1} parent=1 // pred_fallthru
      _
    // Predicated region
    $region6: #{tpu_custom_call.1} parent=1 // pred_check
      _
    $region7: #{tpu_custom_call.1} parent=1 // pred_check_branch
      %22 = sbr.rel (0) target = $region9
    $region8: #{tpu_custom_call.1} parent=1 // pred_region
      %24 = dma.done [#allocation3], 256
    $region9: #{tpu_custom_call.1} parent=1 // pred_fallthru
      _
    %v25 = vld [vmem:[#allocation2] sm:$0xff]
    %v26 = vld [vmem:[#allocation2 + $0x8] sm:$0xff]
    %v27 = vmax.f32 %v25, 0.0
    %v28 = vmax.f32 %v26, 0.0
    %29 = vst [vmem:[#allocation5] sm:$0xff] %v27
    %30 = vst [vmem:[#allocation5 + $0x8] sm:$0xff] %v28
    // Predicated region
    $region10: #{tpu_custom_call.1} parent=1 // pred_check
      _
    $region11: #{tpu_custom_call.1} parent=1 // pred_check_branch
      %32 = sbr.rel (0) target = $region13
    $region12: #{tpu_custom_call.1} parent=1 // pred_region
      %34 = vsyncadd [#allocation4], 0
      %s35 = sshll.u32 [#allocation5], 4
      %s36 = int_to_ptr.vmem [resolvable:$true] %s35
      %s37 = sshll.u32 %s1, 4
      %s38 = int_to_ptr.hbm [resolvable:$true] %s37
      %43 = dma.vmem_to_hbm [thread:$0]  %s36, 256, %s38, [#allocation4], 128, 128, 8
    $region13: #{tpu_custom_call.1} parent=1 // pred_fallthru
      _
    // Predicated region
    $region14: #{tpu_custom_call.1} parent=1 // pred_check
      _
    $region15: #{tpu_custom_call.1} parent=1 // pred_check_branch
      %45 = sbr.rel (0) target = $region17
    $region16: #{tpu_custom_call.1} parent=1 // pred_region
      %47 = dma.done [#allocation4], 256
    $region17: #{tpu_custom_call.1} parent=1 // pred_fallthru
      _
    %48 = vsyncpa [#allocation3], 1
    %49 = vsyncpa [#allocation4], 1

</llo_original>
